<compile_context>
chip_gen: v7x
topology: tpu7x:2x2x1
jax: 0.10.0
libtpu: 0.0.40
codegen_flags: <defaults>
</compile_context>

<pallas_src>
import string

import jax
import jax.numpy as jnp
from jax import lax
from jax.experimental import pallas as pl
from jax.experimental.pallas import tpu as pltpu

# ----------------------------------------------------------------------------
# Vocab construction (mirrors Light_Cube.py)
# ----------------------------------------------------------------------------
alphabet_lower = list(string.ascii_lowercase)
alphabet_upper = list(string.ascii_uppercase)
digits = list(string.digits)
space = [' ']
special_tokens = ['<PAD>', '<UNK>', '<START>', '<END>']
predefined_vocab = special_tokens + alphabet_upper + alphabet_lower + digits + space
token2idx = {token: idx for idx, token in enumerate(predefined_vocab)}
VOCAB_SIZE = len(token2idx)        # 67
EMBEDDING_DIM = 50
NUM_SLITS = 4                      # stored on the module but unused in forward
NUM_LAYERS = 3


def _round_up(x, m):
    return ((x + m - 1) // m) * m


# ----------------------------------------------------------------------------
# Pallas kernel: exactly two MXU matmuls per row tile.
# ----------------------------------------------------------------------------
def _photon_kernel(ids_ref, table_ref, w2_ref, b_ref, out_ref):
    """ids_ref   : (TM, 1)       int32   -- token ids for this row tile
       table_ref : (VPAD, DPAD)  wdtype  -- embedding @ folded complex chain
       w2_ref    : (DPAD, VPAD)  wdtype  -- [W_out; W_out], zero-padded
       b_ref     : (1, VPAD)     float32 -- bias, vocab-padded
       out_ref   : (TM, VPAD)    odtype  -- logits (lane-dense)
    """
    tm = out_ref.shape[0]
    vpad = table_ref.shape[0]

    # Fused embedding gather + full linear layer chain: one-hot @ folded table.
    ids = ids_ref[...]                                           # (TM, 1) int32
    onehot = (ids == lax.broadcasted_iota(jnp.int32, (tm, vpad), 1)
              ).astype(table_ref.dtype)                          # (TM, VPAD)
    state = jnp.dot(onehot, table_ref[...],
                    preferred_element_type=jnp.float32)          # (TM, DPAD) f32

    # intensity = real^2 + imag^2 packed in one vector; project via [W; W] + b.
    intensity = state * state                                    # (TM, DPAD) f32
    logits = jnp.dot(intensity.astype(w2_ref.dtype), w2_ref[...],
                     preferred_element_type=jnp.float32) + b_ref[...]
    out_ref[...] = logits.astype(out_ref.dtype)


# ----------------------------------------------------------------------------
# Wrapper
# ----------------------------------------------------------------------------
def photon_interference_forward(input_seq, params, *, num_layers,
                                max_tile_rows=2048,
                                weights_dtype=jnp.bfloat16,
                                out_dtype=jnp.float32):
    """Forward pass matching PhotonInterferenceSeq2Seq.forward.

    input_seq: int32 (batch, seq)
    returns:   (batch, seq, vocab) in out_dtype
    """
    embedding = params["embedding"]        # (V, D) f32
    kappa = params["kappa"]                # (L, D, D)
    phi = params["phi"]                    # (L, D, D)
    w_out = params["w_out"]                # (D, V)  (== Linear.weight.T)
    b_out = params["b_out"]                # (V,)

    batch, seq = input_seq.shape
    vocab, d = embedding.shape
    d2 = 2 * d
    vpad = _round_up(vocab, 128)           # keep exactly 128 (v5e-native N)
    dpad = _round_up(d2, 128)

    # --- fold the whole (purely linear) complex layer chain into the table ---
    m_real, m_imag = kappa[0], phi[0]
    for l in range(1, num_layers):
        m_real, m_imag = (m_real @ kappa[l] - m_imag @ phi[l],
                          m_real @ phi[l] + m_imag @ kappa[l])
    table = embedding @ jnp.concatenate([m_real, m_imag], axis=1)   # (V, 2D)
    table = jnp.pad(table, ((0, vpad - vocab), (0, dpad - d2)))
    table = table.astype(weights_dtype)                             # (VPAD, DPAD)

    # Output projection on packed [real^2 | imag^2]: stacked [W; W], zero-padded.
    w2 = jnp.pad(jnp.concatenate([w_out, w_out], axis=0),
                 ((0, dpad - d2), (0, vpad - vocab))).astype(weights_dtype)
    b2 = jnp.pad(b_out, (0, vpad - vocab)).reshape(1, vpad).astype(jnp.float32)

    # --- row tiling: big tiles, but keep >= 2 grid steps (v7x megacore) -------
    n = batch * seq
    if n < 16:
        tile_rows = _round_up(max(n, 1), 8)                 # single tiny tile
    else:
        align = 8 if n <= 512 else 256
        tile_rows = min(max_tile_rows, _round_up((n + 1) // 2, align))
    n_pad = _round_up(n, tile_rows)
    ids = jnp.pad(input_seq.reshape(-1).astype(jnp.int32),
                  (0, n_pad - n)).reshape(n_pad, 1)
    grid = (n_pad // tile_rows,)

    cost = pl.CostEstimate(
        flops=2 * n_pad * (vpad * dpad + dpad * vpad),
        transcendentals=0,
        bytes_accessed=(ids.size * ids.dtype.itemsize
                        + table.size * table.dtype.itemsize
                        + w2.size * w2.dtype.itemsize
                        + b2.size * b2.dtype.itemsize
                        + n_pad * vpad * jnp.dtype(out_dtype).itemsize),
    )

    logits_flat = pl.pallas_call(
        _photon_kernel,
        out_shape=jax.ShapeDtypeStruct((n_pad, vpad), out_dtype),
        grid=grid,
        in_specs=[
            pl.BlockSpec((tile_rows, 1), lambda i: (i, 0)),      # ids (streamed)
            pl.BlockSpec((vpad, dpad), lambda i: (0, 0)),        # table (resident)
            pl.BlockSpec((dpad, vpad), lambda i: (0, 0)),        # [W;W] (resident)
            pl.BlockSpec((1, vpad), lambda i: (0, 0)),           # bias (resident)
        ],
        out_specs=pl.BlockSpec((tile_rows, vpad), lambda i: (i, 0)),
        compiler_params=pltpu.CompilerParams(
            dimension_semantics=("parallel",),
            vmem_limit_bytes=32 * 1024 * 1024,
        ),
        cost_estimate=cost,
    )(ids, table, w2, b2)

    return logits_flat[:n, :vocab].reshape(batch, seq, vocab)


# ----------------------------------------------------------------------------
# Deterministic parameter init (mimics the PyTorch __init__ distributions)
# ----------------------------------------------------------------------------
def init_params(key, vocab_size, embedding_dim, num_layers):
    k_emb, k_kappa, k_phi, k_w, k_b = jax.random.split(key, 5)
    embedding = jax.random.normal(k_emb, (vocab_size, embedding_dim),
                                  dtype=jnp.float32)
    kappa = 0.1 * jax.random.normal(
        k_kappa, (num_layers, embedding_dim, embedding_dim), dtype=jnp.float32)
    phi = 0.1 * jax.random.normal(
        k_phi, (num_layers, embedding_dim, embedding_dim), dtype=jnp.float32)
    bound = 1.0 / (embedding_dim ** 0.5)
    # stored as (D, V): transpose of torch nn.Linear's (V, D) weight
    w_out = jax.random.uniform(k_w, (embedding_dim, vocab_size),
                               minval=-bound, maxval=bound, dtype=jnp.float32)
    b_out = jax.random.uniform(k_b, (vocab_size,),
                               minval=-bound, maxval=bound, dtype=jnp.float32)
    return {"embedding": embedding, "kappa": kappa, "phi": phi,
            "w_out": w_out, "b_out": b_out}


# Pure-JAX reference (mirrors the PyTorch forward) for a sanity check.
def reference_forward(input_seq, params, *, num_layers):
    emb = jnp.take(params["embedding"], input_seq, axis=0)  # (B, S, D)
    a_real = emb
    a_imag = jnp.zeros_like(emb)
    for l in range(num_layers):
        k = params["kappa"][l]
        p = params["phi"][l]
        new_r = a_real @ k - a_imag @ p
        new_i = a_real @ p + a_imag @ k
        a_real, a_imag = new_r, new_i
    intensity = a_real ** 2 + a_imag ** 2
    return intensity @ params["w_out"] + params["b_out"]


if __name__ == "__main__":
    key = jax.random.PRNGKey(0)
    k_params, k_tokens = jax.random.split(key)

    params = init_params(k_params, VOCAB_SIZE, EMBEDDING_DIM, NUM_LAYERS)

    batch, seq = 2, 8
    input_seq = jax.random.randint(k_tokens, (batch, seq), 0, VOCAB_SIZE,
                                   dtype=jnp.int32)

    ref = reference_forward(input_seq, params, num_layers=NUM_LAYERS)

    # Exactness check of the algebraic fold: f32-weight path vs reference.
    logits_f32 = photon_interference_forward(
        input_seq, params, num_layers=NUM_LAYERS, weights_dtype=jnp.float32)
    logits_f32 = jax.block_until_ready(logits_f32)
    assert logits_f32.shape == (batch, seq, VOCAB_SIZE)
    assert jnp.allclose(logits_f32, ref, atol=1e-4, rtol=1e-4)

    # Default fast path: bf16 MXU operands with f32 accumulation.
    logits = photon_interference_forward(input_seq, params,
                                         num_layers=NUM_LAYERS)
    logits = jax.block_until_ready(logits)
    assert logits.shape == (batch, seq, VOCAB_SIZE)
    assert jnp.allclose(logits, ref, atol=5e-2, rtol=5e-2)

    print("KERNEL_OK")
</pallas_src>

<mosaic_0001>
module attributes {stable_mosaic.version = 11 : i64} {
  func.func @_photon_kernel(%arg0: i32, %arg1: memref<8x1xi32, #tpu.memory_space<vmem>>, %arg2: memref<128x128xf32, #tpu.memory_space<vmem>>, %arg3: memref<128x128xf32, #tpu.memory_space<vmem>>, %arg4: memref<1x128xf32, #tpu.memory_space<vmem>>, %arg5: memref<8x128xf32, #tpu.memory_space<vmem>>) attributes {dimension_semantics = [#tpu.dimension_semantics<parallel>], iteration_bounds = array<i64: 2>, scalar_prefetch = 0 : i64, scratch_operands = 0 : i64, tpu.core_type = #tpu.core_type<tc>, window_params = [{transform_indices = @transform_0, window_bounds = array<i64: 8, 1>}, {pipeline_mode = #tpu.pipeline_mode<synchronous>, transform_indices = @transform_1, window_bounds = array<i64: 128, 128>}, {pipeline_mode = #tpu.pipeline_mode<synchronous>, transform_indices = @transform_2, window_bounds = array<i64: 128, 128>}, {pipeline_mode = #tpu.pipeline_mode<synchronous>, transform_indices = @transform_3, window_bounds = array<i64: 1, 128>}, {transform_indices = @transform_4, window_bounds = array<i64: 8, 128>}]} {
    %c0 = arith.constant 0 : index
    %c0_0 = arith.constant 0 : index
    %0 = vector.load %arg1[%c0, %c0_0] : memref<8x1xi32, #tpu.memory_space<vmem>>, vector<8x1xi32>
    %1 = tpu.iota {dimensions = array<i32: 1>} : vector<8x128xi32>
    %2 = vector.broadcast %0 : vector<8x1xi32> to vector<8x128xi32>
    %3 = arith.cmpi eq, %2, %1 : vector<8x128xi32>
    %4 = arith.extui %3 : vector<8x128xi1> to vector<8x128xi32>
    %5 = arith.sitofp %4 : vector<8x128xi32> to vector<8x128xf32>
    %c0_1 = arith.constant 0 : index
    %c0_2 = arith.constant 0 : index
    %6 = vector.load %arg2[%c0_1, %c0_2] : memref<128x128xf32, #tpu.memory_space<vmem>>, vector<128x128xf32>
    %cst = arith.constant dense<0.000000e+00> : vector<8x128xf32>
    %7 = tpu.matmul %5, %6, %cst {dimension_numbers = #tpu.dot_dimension_numbers<[1], [0], [0], [1], [0, 0, 1, 1], [], []>} : vector<8x128xf32>, vector<128x128xf32>, vector<8x128xf32> -> vector<8x128xf32>
    %8 = arith.mulf %7, %7 : vector<8x128xf32>
    %c0_3 = arith.constant 0 : index
    %c0_4 = arith.constant 0 : index
    %9 = vector.load %arg3[%c0_3, %c0_4] : memref<128x128xf32, #tpu.memory_space<vmem>>, vector<128x128xf32>
    %cst_5 = arith.constant dense<0.000000e+00> : vector<8x128xf32>
    %10 = tpu.matmul %8, %9, %cst_5 {dimension_numbers = #tpu.dot_dimension_numbers<[1], [0], [0], [1], [0, 0, 1, 1], [], []>} : vector<8x128xf32>, vector<128x128xf32>, vector<8x128xf32> -> vector<8x128xf32>
    %c0_6 = arith.constant 0 : index
    %c0_7 = arith.constant 0 : index
    %11 = vector.load %arg4[%c0_6, %c0_7] : memref<1x128xf32, #tpu.memory_space<vmem>>, vector<1x128xf32>
    %12 = vector.broadcast %11 : vector<1x128xf32> to vector<8x128xf32>
    %13 = arith.addf %10, %12 : vector<8x128xf32>
    %c0_8 = arith.constant 0 : index
    %c0_9 = arith.constant 0 : index
    %14 = vector.load %arg5[%c0_8, %c0_9] : memref<8x128xf32, #tpu.memory_space<vmem>>, vector<8x128xf32>
    tpu.vector_store %arg5[%c0_8, %c0_9], %13 {strides = array<i32>} : memref<8x128xf32, #tpu.memory_space<vmem>>, vector<8x128xf32>,
    return
  }
  func.func @transform_0(%arg0: i32) -> (i32, i32) {
    %c0_i32 = arith.constant 0 : i32
    %c0_i32_0 = arith.constant 0 : i32
    return %arg0, %c0_i32 : i32, i32
  }
  func.func @transform_1(%arg0: i32) -> (i32, i32) {
    %c0_i32 = arith.constant 0 : i32
    %c0_i32_0 = arith.constant 0 : i32
    %c0_i32_1 = arith.constant 0 : i32
    return %c0_i32, %c0_i32_0 : i32, i32
  }
  func.func @transform_2(%arg0: i32) -> (i32, i32) {
    %c0_i32 = arith.constant 0 : i32
    %c0_i32_0 = arith.constant 0 : i32
    %c0_i32_1 = arith.constant 0 : i32
    return %c0_i32, %c0_i32_0 : i32, i32
  }
  func.func @transform_3(%arg0: i32) -> (i32, i32) {
    %c0_i32 = arith.constant 0 : i32
    %c0_i32_0 = arith.constant 0 : i32
    %c0_i32_1 = arith.constant 0 : i32
    return %c0_i32, %c0_i32_0 : i32, i32
  }
  func.func @transform_4(%arg0: i32) -> (i32, i32) {
    %c0_i32 = arith.constant 0 : i32
    %c0_i32_0 = arith.constant 0 : i32
    return %arg0, %c0_i32 : i32, i32
  }
}

</mosaic_0001>

<llo_original>
// kernel: tpu_custom_call.1
$region0: #{tpu_custom_call.1}
  #allocation0 [shape = 'u32[]', space=smem, size = 0x4, offset = 0x4, fixed_abs, tag = 'smem constant byte address 0x4 - core index']
  #allocation1 [shape = 'u32[144,128]{1,0:T(1,128)}', space=vmem, size = 0x12000, scoped, tag = 'internal scratch']
  %s0 = inlined_call_operand.vmem [shape: s32[16,1], index: 0, kind: input, shape index: {}]
  %s1 = inlined_call_operand.hbm [shape: f32[128,128], index: 1, kind: input, shape index: {}]
  %s2 = inlined_call_operand.hbm [shape: f32[128,128], index: 2, kind: input, shape index: {}]
  %s3 = inlined_call_operand.vmem [shape: f32[1,128], index: 3, kind: input, shape index: {}]
  %s4 = inlined_call_operand.hbm [shape: f32[16,128], index: 4, kind: output, shape index: {}]
  %s5 = sld [smem:[#allocation0]]
  $region57: #{tpu_custom_call.1} parent=0
    _
  %s7 = ssub.s32 1, %s5
  %s8 = scalar_select 0, %s7, %s5
  $region1: #{tpu_custom_call.1} parent=0
    #allocation2 [shape = 'u8[65536]{0}', space=vmem, size = 0x10000, scoped, tag = 'input window, operand 1, single buffered']
    #allocation3 [shape = 's32[2]{0}', space=sflag, size = 0x8, scoped, tag = 'scoped memory for tpu_custom_call.1']
    #allocation4 [shape = 's32[2]{0}', space=sflag, size = 0x8, scoped, tag = 'scoped memory for tpu_custom_call.1']
    #allocation5 [shape = 'u8[65536]{0}', space=vmem, size = 0x10000, scoped, tag = 'input window, operand 2, single buffered']
    #allocation6 [shape = 's32[1]{0}', space=sflag, size = 0x4, scoped, tag = 'scoped memory for tpu_custom_call.1']
    #allocation7 [shape = 'u8[8192]{0}', space=vmem, size = 0x2000, scoped, tag = 'output window, operand 0']
    %9 = vsyncpa [#allocation3], 0
    %10 = vsyncpa [#allocation6], 0
    %11 = vsyncpa [#allocation4], 0
    %s12 = scalar_lea.sflag [#allocation4], 1
    %13 = vsyncpa %s12, 0
    loop: start=0, step=1, limit=4
    $region2: #{tpu_custom_call.1} parent=1 // loop_pre_header
      _
    $region3: #{tpu_custom_call.1} parent=1 // loop_header
      %s15 = sphi 0, %s19
      %p16 = scmp.ge.s32.totalorder %s15, 4
      %s25 = sphi 0, %s27
      %s28 = sphi 0, %s25
      %s29 = sphi 0, %s28
      %s45 = sphi 0, %s29
      %s49 = sphi 0, %s49
      %s51 = sphi 0, %s49
      %s52 = sphi 0, %s51
      %s66 = sphi 0, %s52
      %s70 = sphi 0, %s70
      %s72 = sphi 0, %s70
      %s73 = sphi 0, %s72
      %s87 = sphi 0, %s73
      %s91 = sphi 0, %s91
      %s93 = sphi 0, %s91
      %s94 = sphi 0, %s93
      %s108 = sphi 0, %s94
      %s114 = sphi 0, %s116
      %s117 = sphi 0, %s114
      %s118 = sphi 0, %s117
      %s134 = sphi 0, %s118
    $region4: #{tpu_custom_call.1} parent=1 // loop_header_branch
      %18 = sbr.rel (%p16) target = $region8
    $region5: #{tpu_custom_call.1} parent=1 // loop_body
      %s20 = ssub.s32 %s15, 1
      %s21 = ssub.s32 %s15, 2
      %s22 = sadd.s32 %s15, 1
      %s23 = ssub.s32 %s15, %s22
      %p24 = scmp.eq.s32.totalorder %s23, 0
      %s26 = sadd.s32 %s25, 1
      %s27 = scalar_select %p24, %s25, %s26
      %p30 = pneg %p24
      %p31 = scmp.eq.s32.totalorder %s15, 1
      %p32 = por %p30, %p31
      %p33 = scmp.ne.s32.totalorder %s25, %s28
      %p34 = scmp.eq.s32.totalorder %s15, 0
      %p35 = por %p33, %p34
      %p36 = scmp.ne.s32.totalorder %s25, %s28
      %p37 = scmp.eq.s32.totalorder %s20, 1
      %p38 = por %p36, %p37
      %p39 = scmp.ne.s32.totalorder %s28, %s29
      %p40 = scmp.eq.s32.totalorder %s20, 0
      %p41 = por %p39, %p40
      %p42 = scmp.ne.s32.totalorder %s28, %s29
      %p43 = scmp.eq.s32.totalorder %s21, 1
      %p44 = por %p42, %p43
      %p46 = scmp.ne.s32.totalorder %s29, %s45
      %p47 = scmp.eq.s32.totalorder %s21, 0
      %p48 = por %p46, %p47
      %s50 = sadd.s32 %s49, 1
      %p53 = scmp.eq.s32.totalorder %s15, 1
      %p54 = scmp.ne.s32.totalorder %s49, %s51
      %p55 = scmp.eq.s32.totalorder %s15, 0
      %p56 = por %p54, %p55
      %p57 = scmp.ne.s32.totalorder %s49, %s51
      %p58 = scmp.eq.s32.totalorder %s20, 1
      %p59 = por %p57, %p58
      %p60 = scmp.ne.s32.totalorder %s51, %s52
      %p61 = scmp.eq.s32.totalorder %s20, 0
      %p62 = por %p60, %p61
      %p63 = scmp.ne.s32.totalorder %s51, %s52
      %p64 = scmp.eq.s32.totalorder %s21, 1
      %p65 = por %p63, %p64
      %p67 = scmp.ne.s32.totalorder %s52, %s66
      %p68 = scmp.eq.s32.totalorder %s21, 0
      %p69 = por %p67, %p68
      %s71 = sadd.s32 %s70, 1
      %p74 = scmp.eq.s32.totalorder %s15, 1
      %p75 = scmp.ne.s32.totalorder %s70, %s72
      %p76 = scmp.eq.s32.totalorder %s15, 0
      %p77 = por %p75, %p76
      %p78 = scmp.ne.s32.totalorder %s70, %s72
      %p79 = scmp.eq.s32.totalorder %s20, 1
      %p80 = por %p78, %p79
      %p81 = scmp.ne.s32.totalorder %s72, %s73
      %p82 = scmp.eq.s32.totalorder %s20, 0
      %p83 = por %p81, %p82
      %p84 = scmp.ne.s32.totalorder %s72, %s73
      %p85 = scmp.eq.s32.totalorder %s21, 1
      %p86 = por %p84, %p85
      %p88 = scmp.ne.s32.totalorder %s73, %s87
      %p89 = scmp.eq.s32.totalorder %s21, 0
      %p90 = por %p88, %p89
      %s92 = sadd.s32 %s91, 1
      %p95 = scmp.eq.s32.totalorder %s15, 1
      %p96 = scmp.ne.s32.totalorder %s91, %s93
      %p97 = scmp.eq.s32.totalorder %s15, 0
      %p98 = por %p96, %p97
      %p99 = scmp.ne.s32.totalorder %s91, %s93
      %p100 = scmp.eq.s32.totalorder %s20, 1
      %p101 = por %p99, %p100
      %p102 = scmp.ne.s32.totalorder %s93, %s94
      %p103 = scmp.eq.s32.totalorder %s20, 0
      %p104 = por %p102, %p103
      %p105 = scmp.ne.s32.totalorder %s93, %s94
      %p106 = scmp.eq.s32.totalorder %s21, 1
      %p107 = por %p105, %p106
      %p109 = scmp.ne.s32.totalorder %s94, %s108
      %p110 = scmp.eq.s32.totalorder %s21, 0
      %p111 = por %p109, %p110
      %s112 = ssub.s32 %s15, %s22
      %p113 = scmp.eq.s32.totalorder %s112, 0
      %s115 = sadd.s32 %s114, 1
      %s116 = scalar_select %p113, %s114, %s115
      %p119 = pneg %p113
      %p120 = scmp.eq.s32.totalorder %s15, 1
      %p121 = por %p119, %p120
      %p122 = scmp.ne.s32.totalorder %s114, %s117
      %p123 = scmp.eq.s32.totalorder %s15, 0
      %p124 = por %p122, %p123
      %p125 = scmp.ne.s32.totalorder %s114, %s117
      %p126 = scmp.eq.s32.totalorder %s20, 1
      %p127 = por %p125, %p126
      %p128 = scmp.ne.s32.totalorder %s117, %s118
      %p129 = scmp.eq.s32.totalorder %s20, 0
      %p130 = por %p128, %p129
      %p131 = scmp.ne.s32.totalorder %s117, %s118
      %p132 = scmp.eq.s32.totalorder %s21, 1
      %p133 = por %p131, %p132
      %p135 = scmp.ne.s32.totalorder %s118, %s134
      %p136 = scmp.eq.s32.totalorder %s21, 0
      %p137 = por %p135, %p136
      %p138 = scmp.le.s32.totalorder 1, %s15
      %p139 = scmp.lt.s32.totalorder %s15, 3
      %p140 = pnand %p138, %p139
      %p141 = pneg %p140
      // Predicated region
      $region9: #{tpu_custom_call.1} parent=5 // pred_check
        _
      $region10: #{tpu_custom_call.1} parent=5 // pred_check_branch
        %143 = sbr.rel (%p140) target = $region12
      $region11: #{tpu_custom_call.1} parent=5 // pred_region
        %s144 = ssub.s32 %s15, 1
        // Predicated region
        $region13: #{tpu_custom_call.1} parent=11 // pred_check
          %p145 = pneg %p62
        $region14: #{tpu_custom_call.1} parent=11 // pred_check_branch
          %147 = sbr.rel (%p145) target = $region16
        $region15: #{tpu_custom_call.1} parent=11 // pred_region
          %s149 = ssub.s32 2048, 2048
          %150 = vsyncadd [#allocation3], %s149
          %s151 = sshll.u32 [#allocation2], 4
          %s152 = int_to_ptr.vmem [resolvable:$true] %s151
          %157 = dma.hbm_to_vmem [thread:$0]  %s1, 2048, %s152, [#allocation3], 128, 128, 8
        $region16: #{tpu_custom_call.1} parent=11 // pred_fallthru
          _
        // Predicated region
        $region17: #{tpu_custom_call.1} parent=11 // pred_check
          %p158 = pneg %p83
        $region18: #{tpu_custom_call.1} parent=11 // pred_check_branch
          %160 = sbr.rel (%p158) target = $region20
        $region19: #{tpu_custom_call.1} parent=11 // pred_region
          %s162 = ssub.s32 2048, 2048
          %163 = vsyncadd [#allocation6], %s162
          %s164 = sshll.u32 [#allocation5], 4
          %s165 = int_to_ptr.vmem [resolvable:$true] %s164
          %170 = dma.hbm_to_vmem [thread:$0]  %s2, 2048, %s165, [#allocation6], 128, 128, 8
        $region20: #{tpu_custom_call.1} parent=11 // pred_fallthru
          _
        // Predicated region
        $region21: #{tpu_custom_call.1} parent=11 // pred_check
          %p171 = pneg %p104
        $region22: #{tpu_custom_call.1} parent=11 // pred_check_branch
          %173 = sbr.rel (%p171) target = $region24
        $region23: #{tpu_custom_call.1} parent=11 // pred_region
          _
        $region24: #{tpu_custom_call.1} parent=11 // pred_fallthru
          _
      $region12: #{tpu_custom_call.1} parent=5 // pred_fallthru
        _
      %p174 = scmp.lt.s32.totalorder %s15, 2
      // Predicated region
      $region25: #{tpu_custom_call.1} parent=5 // pred_check
        %p175 = pneg %p174
      $region26: #{tpu_custom_call.1} parent=5 // pred_check_branch
        %177 = sbr.rel (%p175) target = $region28
      $region27: #{tpu_custom_call.1} parent=5 // pred_region
        // Predicated region
        $region29: #{tpu_custom_call.1} parent=27 // pred_check
          %p178 = pneg %p35
        $region30: #{tpu_custom_call.1} parent=27 // pred_check_branch
          %180 = sbr.rel (%p178) target = $region32
        $region31: #{tpu_custom_call.1} parent=27 // pred_region
          %p181 = scmp.lt.s32.totalorder %s15, 1
          %s182 = scalar_select %p181, %s15, 1
          %s183 = smul.addr %s182, 8
          %s184 = scalar_lea.vmem %s0, %s183
        $region32: #{tpu_custom_call.1} parent=27 // pred_fallthru
          _
      $region28: #{tpu_custom_call.1} parent=5 // pred_fallthru
        _
      %p185 = scmp.le.s32.totalorder 1, %s15
      %p186 = scmp.lt.s32.totalorder %s15, 3
      %p187 = pnand %p185, %p186
      %p188 = pneg %p187
      // Predicated region
      $region33: #{tpu_custom_call.1} parent=5 // pred_check
        _
      $region34: #{tpu_custom_call.1} parent=5 // pred_check_branch
        %190 = sbr.rel (%p187) target = $region36
      $region35: #{tpu_custom_call.1} parent=5 // pred_region
        %s191 = ssub.s32 %s15, 1
        // Predicated region
        $region37: #{tpu_custom_call.1} parent=35 // pred_check
          %p192 = pneg %p62
        $region38: #{tpu_custom_call.1} parent=35 // pred_check_branch
          %194 = sbr.rel (%p192) target = $region40
        $region39: #{tpu_custom_call.1} parent=35 // pred_region
          %195 = dma.done [#allocation3], 2048
        $region40: #{tpu_custom_call.1} parent=35 // pred_fallthru
          _
        // Predicated region
        $region41: #{tpu_custom_call.1} parent=35 // pred_check
          %p196 = pneg %p83
        $region42: #{tpu_custom_call.1} parent=35 // pred_check_branch
          %198 = sbr.rel (%p196) target = $region44
        $region43: #{tpu_custom_call.1} parent=35 // pred_region
          %199 = dma.done [#allocation6], 2048
        $region44: #{tpu_custom_call.1} parent=35 // pred_fallthru
          _
        %p200 = scmp.lt.s32.totalorder %s20, 1
        %s201 = scalar_select %p200, %s20, 1
        %s202 = smul.addr %s201, 8
        %s203 = scalar_lea.vmem %s0, %s202
        %p204 = pneg %p41
        %p205 = pneg %p38
        %p206 = pneg %p62
        %p207 = pneg %p59
        %p208 = pneg %p83
        %p209 = pneg %p80
        %p210 = pneg %p104
        %p211 = pneg %p101
        %p212 = pneg %p130
        %p213 = pneg %p127
        %s214 = sand.u32 %s117, 1
        %s215 = scalar_lea.sflag [#allocation4], %s214
        %s216 = sand.u32 %s117, 1
        %s217 = smul.addr %s216, 8
        %s218 = scalar_lea.vmem [#allocation7], %s217
        %p219 = scmp.lt.s32.totalorder %s20, 1
        %s220 = scalar_select %p219, %s20, 1
        %s221 = smul.addr %s220, 8
        %s222 = scalar_lea.vmem %s0, %s221
        %v223 = vld [vmem:[%s222] sm:$0xff]
        %v224 = vlaneseq
        %v225 = vand.u32 %v224, 127
        %226 = vset.pattern.permute.xlu0 0
        %227 = vperm.xlu0 %226, %v223
        %v228 = vpop.permute.xlu0 %227
        %vm229 = vcmp.eq.s32.totalorder %v228, %v225
        %v230 = vsel %vm229, 1, 0
        %v231 = vcvt.s32.f32 %v230
        %v232 = vld [vmem:[#allocation2] sm:$0xff]
        %v233 = vld [vmem:[#allocation2 + $0x8] sm:$0xff]
        %v234 = vld [vmem:[#allocation2 + $0x10] sm:$0xff]
        %v235 = vld [vmem:[#allocation2 + $0x18] sm:$0xff]
        %v236 = vld [vmem:[#allocation2 + $0x20] sm:$0xff]
        %v237 = vld [vmem:[#allocation2 + $0x28] sm:$0xff]
        %v238 = vld [vmem:[#allocation2 + $0x30] sm:$0xff]
        %v239 = vld [vmem:[#allocation2 + $0x38] sm:$0xff]
        %v240 = vld [vmem:[#allocation2 + $0x40] sm:$0xff]
        %v241 = vld [vmem:[#allocation2 + $0x48] sm:$0xff]
        %v242 = vld [vmem:[#allocation2 + $0x50] sm:$0xff]
        %v243 = vld [vmem:[#allocation2 + $0x58] sm:$0xff]
        %v244 = vld [vmem:[#allocation2 + $0x60] sm:$0xff]
        %v245 = vld [vmem:[#allocation2 + $0x68] sm:$0xff]
        %v246 = vld [vmem:[#allocation2 + $0x70] sm:$0xff]
        %v247 = vld [vmem:[#allocation2 + $0x78] sm:$0xff]
        %248 = vmatprep.subr.mxu0 0.0
        %249 = vmatpush1.msra.mxu0 %v232
        %250 = vmatprep.subr.mxu0 0.0
        %251 = vmatpush1.msra.mxu0 %v233
        %252 = vmatprep.subr.mxu0 0.0
        %253 = vmatpush1.msra.mxu0 %v234
        %254 = vmatprep.subr.mxu0 0.0
        %255 = vmatpush1.msra.mxu0 %v235
        %256 = vmatprep.subr.mxu0 0.0
        %257 = vmatpush1.msra.mxu0 %v236
        %258 = vmatprep.subr.mxu0 0.0
        %259 = vmatpush1.msra.mxu0 %v237
        %260 = vmatprep.subr.mxu0 0.0
        %261 = vmatpush1.msra.mxu0 %v238
        %262 = vmatprep.subr.mxu0 0.0
        %263 = vmatpush1.msra.mxu0 %v239
        %264 = vmatprep.subr.mxu0 0.0
        %265 = vmatpush1.msra.mxu0 %v240
        %266 = vmatprep.subr.mxu0 0.0
        %267 = vmatpush1.msra.mxu0 %v241
        %268 = vmatprep.subr.mxu0 0.0
        %269 = vmatpush1.msra.mxu0 %v242
        %270 = vmatprep.subr.mxu0 0.0
        %271 = vmatpush1.msra.mxu0 %v243
        %272 = vmatprep.subr.mxu0 0.0
        %273 = vmatpush1.msra.mxu0 %v244
        %274 = vmatprep.subr.mxu0 0.0
        %275 = vmatpush1.msra.mxu0 %v245
        %276 = vmatprep.subr.mxu0 0.0
        %277 = vmatpush1.msra.mxu0 %v246
        %278 = vmatprep.subr.mxu0 0.0
        %279 = vmatpush1.msra.mxu0 %v247
        %280 = vmatprep.subr.mxu0 0.0
        %281 = vmatpush1.msra.mxu0 0.0
        %282 = vmatprep.subr.mxu0 0.0
        %283 = vmatpush1.msra.mxu0 0.0
        %284 = vmatprep.subr.mxu0 0.0
        %285 = vmatpush1.msra.mxu0 0.0
        %286 = vmatprep.subr.mxu0 0.0
        %287 = vmatpush1.msra.mxu0 0.0
        %288 = vmatprep.subr.mxu0 0.0
        %289 = vmatpush1.msra.mxu0 0.0
        %290 = vmatprep.subr.mxu0 0.0
        %291 = vmatpush1.msra.mxu0 0.0
        %292 = vmatprep.subr.mxu0 0.0
        %293 = vmatpush1.msra.mxu0 0.0
        %294 = vmatprep.subr.mxu0 0.0
        %295 = vmatpush1.msra.mxu0 0.0
        %296 = vmatprep.subr.mxu0 0.0
        %297 = vmatpush1.msra.mxu0 0.0
        %298 = vmatprep.subr.mxu0 0.0
        %299 = vmatpush1.msra.mxu0 0.0
        %300 = vmatprep.subr.mxu0 0.0
        %301 = vmatpush1.msra.mxu0 0.0
        %302 = vmatprep.subr.mxu0 0.0
        %303 = vmatpush1.msra.mxu0 0.0
        %304 = vmatprep.subr.mxu0 0.0
        %305 = vmatpush1.msra.mxu0 0.0
        %306 = vmatprep.subr.mxu0 0.0
        %307 = vmatpush1.msra.mxu0 0.0
        %308 = vmatprep.subr.mxu0 0.0
        %309 = vmatpush1.msra.mxu0 0.0
        %310 = vmatprep.subr.mxu0 0.0
        %311 = vmatpush1.msra.mxu0 0.0
        %312 = vmatprep.mubr.f32.mxu0 0.0
        %313 = vmatmul.mubr.f32.gmra.mrb[0].mxu0 %v231
        %v314 = vpop.f32.mrb[0].mxu0
        %v315 = vadd.f32 0.0, %v314
        %v316 = vpop.f32.mrb[0].mxu0
        %317 = vdwg.mxu0
        %v318 = vmul.f32 %v315, %v315
        %v319 = vld [vmem:[#allocation5] sm:$0xff]
        %v320 = vld [vmem:[#allocation5 + $0x8] sm:$0xff]
        %v321 = vld [vmem:[#allocation5 + $0x10] sm:$0xff]
        %v322 = vld [vmem:[#allocation5 + $0x18] sm:$0xff]
        %v323 = vld [vmem:[#allocation5 + $0x20] sm:$0xff]
        %v324 = vld [vmem:[#allocation5 + $0x28] sm:$0xff]
        %v325 = vld [vmem:[#allocation5 + $0x30] sm:$0xff]
        %v326 = vld [vmem:[#allocation5 + $0x38] sm:$0xff]
        %v327 = vld [vmem:[#allocation5 + $0x40] sm:$0xff]
        %v328 = vld [vmem:[#allocation5 + $0x48] sm:$0xff]
        %v329 = vld [vmem:[#allocation5 + $0x50] sm:$0xff]
        %v330 = vld [vmem:[#allocation5 + $0x58] sm:$0xff]
        %v331 = vld [vmem:[#allocation5 + $0x60] sm:$0xff]
        %v332 = vld [vmem:[#allocation5 + $0x68] sm:$0xff]
        %v333 = vld [vmem:[#allocation5 + $0x70] sm:$0xff]
        %v334 = vld [vmem:[#allocation5 + $0x78] sm:$0xff]
        %v335 = vld [vmem:[%s3] sm:$0x1]
        %v337 = vlaneseq
        %v338 = vshrl.u32 %v337, 7
        %v339 = vsub.s32 0, %v338
        %v340 = vrot.slane %v335, %v339
        %342 = vmatprep.subr.mxu0 0.0
        %343 = vmatpush1.msra.mxu0 %v319
        %344 = vmatprep.subr.mxu0 0.0
        %345 = vmatpush1.msra.mxu0 %v320
        %346 = vmatprep.subr.mxu0 0.0
        %347 = vmatpush1.msra.mxu0 %v321
        %348 = vmatprep.subr.mxu0 0.0
        %349 = vmatpush1.msra.mxu0 %v322
        %350 = vmatprep.subr.mxu0 0.0
        %351 = vmatpush1.msra.mxu0 %v323
        %352 = vmatprep.subr.mxu0 0.0
        %353 = vmatpush1.msra.mxu0 %v324
        %354 = vmatprep.subr.mxu0 0.0
        %355 = vmatpush1.msra.mxu0 %v325
        %356 = vmatprep.subr.mxu0 0.0
        %357 = vmatpush1.msra.mxu0 %v326
        %358 = vmatprep.subr.mxu0 0.0
        %359 = vmatpush1.msra.mxu0 %v327
        %360 = vmatprep.subr.mxu0 0.0
        %361 = vmatpush1.msra.mxu0 %v328
        %362 = vmatprep.subr.mxu0 0.0
        %363 = vmatpush1.msra.mxu0 %v329
        %364 = vmatprep.subr.mxu0 0.0
        %365 = vmatpush1.msra.mxu0 %v330
        %366 = vmatprep.subr.mxu0 0.0
        %367 = vmatpush1.msra.mxu0 %v331
        %368 = vmatprep.subr.mxu0 0.0
        %369 = vmatpush1.msra.mxu0 %v332
        %370 = vmatprep.subr.mxu0 0.0
        %371 = vmatpush1.msra.mxu0 %v333
        %372 = vmatprep.subr.mxu0 0.0
        %373 = vmatpush1.msra.mxu0 %v334
        %374 = vmatprep.subr.mxu0 0.0
        %375 = vmatpush1.msra.mxu0 0.0
        %376 = vmatprep.subr.mxu0 0.0
        %377 = vmatpush1.msra.mxu0 0.0
        %378 = vmatprep.subr.mxu0 0.0
        %379 = vmatpush1.msra.mxu0 0.0
        %380 = vmatprep.subr.mxu0 0.0
        %381 = vmatpush1.msra.mxu0 0.0
        %382 = vmatprep.subr.mxu0 0.0
        %383 = vmatpush1.msra.mxu0 0.0
        %384 = vmatprep.subr.mxu0 0.0
        %385 = vmatpush1.msra.mxu0 0.0
        %386 = vmatprep.subr.mxu0 0.0
        %387 = vmatpush1.msra.mxu0 0.0
        %388 = vmatprep.subr.mxu0 0.0
        %389 = vmatpush1.msra.mxu0 0.0
        %390 = vmatprep.subr.mxu0 0.0
        %391 = vmatpush1.msra.mxu0 0.0
        %392 = vmatprep.subr.mxu0 0.0
        %393 = vmatpush1.msra.mxu0 0.0
        %394 = vmatprep.subr.mxu0 0.0
        %395 = vmatpush1.msra.mxu0 0.0
        %396 = vmatprep.subr.mxu0 0.0
        %397 = vmatpush1.msra.mxu0 0.0
        %398 = vmatprep.subr.mxu0 0.0
        %399 = vmatpush1.msra.mxu0 0.0
        %400 = vmatprep.subr.mxu0 0.0
        %401 = vmatpush1.msra.mxu0 0.0
        %402 = vmatprep.subr.mxu0 0.0
        %403 = vmatpush1.msra.mxu0 0.0
        %404 = vmatprep.subr.mxu0 0.0
        %405 = vmatpush1.msra.mxu0 0.0
        %406 = vmatprep.mubr.f32.mxu0 0.0
        %407 = vmatmul.mubr.f32.gmra.mrb[0].mxu0 %v318
        %v408 = vpop.f32.mrb[0].mxu0
        %v409 = vadd.f32 %v340, %v408
        %v410 = vpop.f32.mrb[0].mxu0
        %411 = vdwg.mxu0
        %412 = vst [vmem:[%s218] sm:$0xff] %v409
        %s413 = sand.u32 %s117, 1
        %s414 = scalar_lea.sflag [#allocation4], %s413
        %s415 = sand.u32 %s117, 1
        %s416 = smul.addr %s415, 8
        %s417 = scalar_lea.vmem [#allocation7], %s416
        // Predicated region
        $region45: #{tpu_custom_call.1} parent=35 // pred_check
          %p418 = pneg %p127
        $region46: #{tpu_custom_call.1} parent=35 // pred_check_branch
          %420 = sbr.rel (%p418) target = $region48
        $region47: #{tpu_custom_call.1} parent=35 // pred_region
          %s422 = ssub.s32 128, 128
          %423 = vsyncadd %s414, %s422
          %s424 = smul.addr %s20, 128
          %s425 = scalar_lea.hbm %s4, %s424
          %s427 = sshll.u32 %s417, 4
          %s428 = int_to_ptr.vmem [resolvable:$true] %s427
          %430 = dma.vmem_to_hbm [thread:$0]  %s428, 128, %s425, %s414
        $region48: #{tpu_custom_call.1} parent=35 // pred_fallthru
          _
      $region36: #{tpu_custom_call.1} parent=5 // pred_fallthru
        _
      %p431 = scmp.le.s32.totalorder 2, %s15
      // Predicated region
      $region49: #{tpu_custom_call.1} parent=5 // pred_check
        %p432 = pneg %p431
      $region50: #{tpu_custom_call.1} parent=5 // pred_check_branch
        %434 = sbr.rel (%p432) target = $region52
      $region51: #{tpu_custom_call.1} parent=5 // pred_region
        %s435 = ssub.s32 %s15, 2
        // Predicated region
        $region53: #{tpu_custom_call.1} parent=51 // pred_check
          %p436 = pneg %p133
        $region54: #{tpu_custom_call.1} parent=51 // pred_check_branch
          %438 = sbr.rel (%p436) target = $region56
        $region55: #{tpu_custom_call.1} parent=51 // pred_region
          %s439 = sand.u32 %s118, 1
          %s440 = scalar_lea.sflag [#allocation4], %s439
          %s441 = sand.u32 %s118, 1
          %s442 = smul.addr %s441, 8
          %s443 = scalar_lea.vmem [#allocation7], %s442
          %444 = dma.done %s440, 128
        $region56: #{tpu_custom_call.1} parent=51 // pred_fallthru
          _
      $region52: #{tpu_custom_call.1} parent=5 // pred_fallthru
        _
    $region6: #{tpu_custom_call.1} parent=1 // loop_footer
      %s19 = sadd.s32 1, %s15
    $region7: #{tpu_custom_call.1} parent=1 // loop_footer_branch
      %14 = sbr.rel target = $region3
    $region8: #{tpu_custom_call.1} parent=1 // loop_exit
      _
    %445 = vsyncpa [#allocation3], 1
    %s446 = scalar_lea.sflag [#allocation3], 1
    %447 = vsyncpa %s446, 1
    %448 = vsyncpa [#allocation6], 1
    %449 = vsyncpa [#allocation4], 1
    %s450 = scalar_lea.sflag [#allocation4], 1
    %451 = vsyncpa %s450, 1

</llo_original>
